<compile_context>
chip_gen: v7x
topology: tpu7x:2x2x1
jax: 0.10.0
libtpu: 0.0.40
codegen_flags: <defaults>
</compile_context>

<pallas_src>
import functools

import jax
import jax.numpy as jnp
from jax.experimental import pallas as pl
from jax.experimental.pallas import tpu as pltpu

_H1 = 128    # fc1 output width (already lane-dense)
_H2 = 64     # fc2 output width (zero-padded to 128 lanes inside the slab)
_LANE = 128  # lane width everything is padded to


def _round_up(x, m):
    return ((x + m - 1) // m) * m


def _cdiv(a, b):
    return (a + b - 1) // b


def _qnetwork_kernel(x_ref, p_ref, out_ref, *, s8, off_b1, off_w2, off_b2,
                     off_w3, off_b3):
    """fc1 -> relu -> fc2 -> relu -> fc3 for one (network, batch-tile) step.

    x_ref:   (1, tile_b, s8)   f32  states, feature dim zero-padded to s8
    p_ref:   (1, rows, 128)    f32  packed parameter slab for this network
    out_ref: (1, tile_b, 128)  f32  lane-dense; Q values in [:, :action_size]
    """
    x = x_ref[0]                                              # (tile_b, s8)

    # ---- fc1 on the MXU (K = s8; slab rows state_size..s8-1 are zero).
    h1 = jnp.dot(x, p_ref[0, 0:s8, :], preferred_element_type=jnp.float32)
    h1 = jnp.maximum(h1 + p_ref[0, off_b1:off_b1 + 1, :], 0.0)

    # ---- fc2 + ReLU (weights zero-padded to 128 lanes; h2 lanes 64:127
    #      stay exactly 0 through the ReLU).
    h2 = jnp.dot(h1, p_ref[0, off_w2:off_w2 + _H1, :],
                 preferred_element_type=jnp.float32)
    h2 = jnp.maximum(h2 + p_ref[0, off_b2:off_b2 + 1, :], 0.0)

    # ---- fc3 (K padded to 128; the padded K lanes of h2 are exactly zero).
    q = jnp.dot(h2, p_ref[0, off_w3:off_w3 + _LANE, :],
                preferred_element_type=jnp.float32)
    out_ref[0] = q + p_ref[0, off_b3:off_b3 + 1, :]


def pack_qnetwork_params(params):
    """Pack all weights/biases into a single lane-dense (rows, 128) f32 slab.

    Row layout (every section offset is a multiple of 8 sublanes):
      [0 : s8]            w1   (state_size, 128), rows state_size..s8-1 zero
      [off_b1]            b1   (128,)
      [off_w2 : +128]     w2   zero-padded (128, 128); real columns 0:64
      [off_b2]            b2   zero-padded to 128 lanes
      [off_w3 : +128]     w3   zero-padded (128, 128); real block (64, action)
      [off_b3]            b3   zero-padded to 128 lanes
    Zero padding keeps the padded lanes of h2 / q exactly zero, so slicing
    the output back to action_size reproduces the un-padded network.
    """
    w1, b1 = params["w1"], params["b1"]
    w2, b2 = params["w2"], params["b2"]
    w3, b3 = params["w3"], params["b3"]
    state_size = w1.shape[0]
    action_size = w3.shape[1]

    s8 = _round_up(state_size, 8)
    off_b1 = s8
    off_w2 = off_b1 + 8
    off_b2 = off_w2 + _H1
    off_w3 = off_b2 + 8
    off_b3 = off_w3 + _LANE
    total = off_b3 + 8

    packed = jnp.zeros((total, _LANE), jnp.float32)
    packed = packed.at[0:state_size, :].set(w1.astype(jnp.float32))
    packed = packed.at[off_b1, :].set(b1.astype(jnp.float32))
    packed = packed.at[off_w2:off_w2 + _H1, 0:_H2].set(w2.astype(jnp.float32))
    packed = packed.at[off_b2, 0:_H2].set(b2.astype(jnp.float32))
    packed = packed.at[off_w3:off_w3 + _H2, 0:action_size].set(
        w3.astype(jnp.float32))
    packed = packed.at[off_b3, 0:action_size].set(b3.astype(jnp.float32))

    meta = dict(state_size=state_size, action_size=action_size, s8=s8,
                off_b1=off_b1, off_w2=off_w2, off_b2=off_b2,
                off_w3=off_w3, off_b3=off_b3)
    return packed, meta


def stack_packed_params(packed_list):
    """Stack per-network slabs into one (N, rows, 128) array (same meta)."""
    return jnp.stack(packed_list, axis=0)


def qnetwork_forward_stacked(states, packed, meta, *, max_batch_tile=1024):
    """Fused forward for N networks in ONE kernel launch.

    states: (N, batch, state_size) f32  (e.g. N=2: [states, next_states])
    packed: (N, rows, 128)         f32  (e.g. [online slab, target slab])
    returns (N, batch, action_size) f32
    """
    n_nets, batch, state_size = states.shape
    assert packed.shape[0] == n_nets
    assert state_size == meta["state_size"]
    action_size = meta["action_size"]
    s8 = meta["s8"]
    rows = packed.shape[1]

    # Balanced batch tiles: pad waste < 8 rows per tile; force >= 2 tiles once
    # the batch is large so the "parallel" axes shard across v7x's two TCs.
    padded = _round_up(batch, 8)
    n_tiles = _cdiv(padded, max_batch_tile)
    if padded >= 1024 and n_tiles < 2:
        n_tiles = 2
    tile_b = _round_up(_cdiv(padded, n_tiles), 8)
    padded = tile_b * n_tiles

    # One pad: batch rows up to `padded`, feature dim up to s8 (so fc1 runs
    # on the MXU against slab rows 0:s8 -- those extra rows are zero).
    if padded != batch or s8 != state_size:
        states = jnp.pad(states,
                         ((0, 0), (0, padded - batch), (0, s8 - state_size)))

    kernel = functools.partial(
        _qnetwork_kernel, s8=s8,
        off_b1=meta["off_b1"], off_w2=meta["off_w2"], off_b2=meta["off_b2"],
        off_w3=meta["off_w3"], off_b3=meta["off_b3"])

    out = pl.pallas_call(
        kernel,
        out_shape=jax.ShapeDtypeStruct((n_nets, padded, _LANE), jnp.float32),
        grid=(n_nets, n_tiles),
        in_specs=[
            pl.BlockSpec((1, tile_b, s8), lambda n, i: (n, i, 0)),
            pl.BlockSpec((1, rows, _LANE), lambda n, i: (n, 0, 0)),
        ],
        out_specs=pl.BlockSpec((1, tile_b, _LANE), lambda n, i: (n, i, 0)),
        compiler_params=pltpu.CompilerParams(
            dimension_semantics=("parallel", "parallel")),
    )(states, packed)

    # Lane-dense kernel output -> real Q-value shape.
    return out[:, :batch, :action_size]


def qnetwork_forward(state, packed, meta, *, max_batch_tile=1024):
    """Single-network convenience wrapper: [batch, S] -> [batch, A]."""
    out = qnetwork_forward_stacked(state[None], packed[None], meta,
                                   max_batch_tile=max_batch_tile)
    return out[0]


def init_qnetwork_params(key, state_size, action_size):
    """Deterministic init mimicking PyTorch nn.Linear default:
    U(-1/sqrt(fan_in), 1/sqrt(fan_in)) for both weight and bias.
    Weights are stored [in_features, out_features]."""
    keys = jax.random.split(key, 6)

    def linear(kw, kb, fan_in, fan_out):
        bound = 1.0 / jnp.sqrt(jnp.float32(fan_in))
        w = jax.random.uniform(kw, (fan_in, fan_out), jnp.float32,
                               minval=-bound, maxval=bound)
        b = jax.random.uniform(kb, (fan_out,), jnp.float32,
                               minval=-bound, maxval=bound)
        return w, b

    w1, b1 = linear(keys[0], keys[1], state_size, _H1)
    w2, b2 = linear(keys[2], keys[3], _H1, _H2)
    w3, b3 = linear(keys[4], keys[5], _H2, action_size)
    return {"w1": w1, "b1": b1, "w2": w2, "b2": b2, "w3": w3, "b3": b3}


def _reference_forward(state, params):
    h1 = jnp.maximum(state @ params["w1"] + params["b1"], 0.0)
    h2 = jnp.maximum(h1 @ params["w2"] + params["b2"], 0.0)
    return h2 @ params["w3"] + params["b3"]


if __name__ == "__main__":
    # MountainCar-v0: state_size=2, action_size=3. Small batch.
    state_size, action_size, batch = 2, 3, 8

    key = jax.random.PRNGKey(0)
    k_online, k_target, k_s, k_ns = jax.random.split(key, 4)
    online_params = init_qnetwork_params(k_online, state_size, action_size)
    target_params = init_qnetwork_params(k_target, state_size, action_size)
    states = jax.random.normal(k_s, (batch, state_size), jnp.float32)
    next_states = jax.random.normal(k_ns, (batch, state_size), jnp.float32)

    # Pack once per network; stack so one launch serves both DQN forwards.
    online_packed, meta = pack_qnetwork_params(online_params)
    target_packed, _ = pack_qnetwork_params(target_params)
    packed_stack = stack_packed_params([online_packed, target_packed])
    states_stack = jnp.stack([states, next_states], axis=0)

    # Fused online-net(states) + target-net(next_states) in ONE kernel launch.
    q_stack = qnetwork_forward_stacked(states_stack, packed_stack, meta)
    q_stack = jax.block_until_ready(q_stack)
    assert q_stack.shape == (2, batch, action_size)

    q_online_ref = _reference_forward(states, online_params)
    q_target_ref = _reference_forward(next_states, target_params)
    assert jnp.allclose(q_stack[0], q_online_ref, atol=1e-4, rtol=1e-4), \
        "online-net mismatch vs reference"
    assert jnp.allclose(q_stack[1], q_target_ref, atol=1e-4, rtol=1e-4), \
        "target-net mismatch vs reference"

    # Single-network convenience path (acting / greedy-action selection).
    q_single = jax.block_until_ready(
        qnetwork_forward(states, online_packed, meta))
    assert q_single.shape == (batch, action_size)
    assert jnp.allclose(q_single, q_online_ref, atol=1e-4, rtol=1e-4), \
        "single-net mismatch vs reference"

    print("KERNEL_OK")
</pallas_src>

<mosaic_0001>
module attributes {stable_mosaic.version = 11 : i64} {
  func.func @_qnetwork_kernel(%arg0: i32, %arg1: i32, %arg2: memref<1x8x8xf32, #tpu.memory_space<vmem>>, %arg3: memref<1x288x128xf32, #tpu.memory_space<vmem>>, %arg4: memref<1x8x128xf32, #tpu.memory_space<vmem>>) attributes {dimension_semantics = [#tpu.dimension_semantics<parallel>, #tpu.dimension_semantics<parallel>], iteration_bounds = array<i64: 2, 1>, scalar_prefetch = 0 : i64, scratch_operands = 0 : i64, tpu.core_type = #tpu.core_type<tc>, window_params = [{transform_indices = @transform_0, window_bounds = array<i64: 1, 8, 8>}, {transform_indices = @transform_1, window_bounds = array<i64: 1, 288, 128>}, {transform_indices = @transform_2, window_bounds = array<i64: 1, 8, 128>}]} {
    %c0 = arith.constant 0 : index
    %c0_0 = arith.constant 0 : index
    %c0_1 = arith.constant 0 : index
    %0 = vector.load %arg2[%c0, %c0_0, %c0_1] : memref<1x8x8xf32, #tpu.memory_space<vmem>>, vector<1x8x8xf32>
    %1 = vector.shape_cast %0 : vector<1x8x8xf32> to vector<8x8xf32>
    %c0_2 = arith.constant 0 : index
    %c0_3 = arith.constant 0 : index
    %c0_4 = arith.constant 0 : index
    %2 = vector.load %arg3[%c0_2, %c0_3, %c0_4] : memref<1x288x128xf32, #tpu.memory_space<vmem>>, vector<1x8x128xf32>
    %3 = vector.shape_cast %2 : vector<1x8x128xf32> to vector<8x128xf32>
    %cst = arith.constant dense<0.000000e+00> : vector<8x128xf32>
    %4 = tpu.matmul %1, %3, %cst {dimension_numbers = #tpu.dot_dimension_numbers<[1], [0], [0], [1], [0, 0, 1, 1], [], []>} : vector<8x8xf32>, vector<8x128xf32>, vector<8x128xf32> -> vector<8x128xf32>
    %c0_5 = arith.constant 0 : index
    %c8 = arith.constant 8 : index
    %c0_6 = arith.constant 0 : index
    %5 = vector.load %arg3[%c0_5, %c8, %c0_6] : memref<1x288x128xf32, #tpu.memory_space<vmem>>, vector<1x1x128xf32>
    %6 = vector.shape_cast %5 : vector<1x1x128xf32> to vector<1x128xf32>
    %7 = vector.broadcast %6 : vector<1x128xf32> to vector<8x128xf32>
    %8 = arith.addf %4, %7 : vector<8x128xf32>
    %cst_7 = arith.constant 0.000000e+00 : f32
    %9 = vector.broadcast %cst_7 : f32 to vector<8x128xf32>
    %10 = arith.maximumf %8, %9 : vector<8x128xf32>
    %c0_8 = arith.constant 0 : index
    %c16 = arith.constant 16 : index
    %c0_9 = arith.constant 0 : index
    %11 = vector.load %arg3[%c0_8, %c16, %c0_9] : memref<1x288x128xf32, #tpu.memory_space<vmem>>, vector<1x128x128xf32>
    %12 = vector.shape_cast %11 : vector<1x128x128xf32> to vector<128x128xf32>
    %cst_10 = arith.constant dense<0.000000e+00> : vector<8x128xf32>
    %13 = tpu.matmul %10, %12, %cst_10 {dimension_numbers = #tpu.dot_dimension_numbers<[1], [0], [0], [1], [0, 0, 1, 1], [], []>} : vector<8x128xf32>, vector<128x128xf32>, vector<8x128xf32> -> vector<8x128xf32>
    %c0_11 = arith.constant 0 : index
    %c144 = arith.constant 144 : index
    %c0_12 = arith.constant 0 : index
    %14 = vector.load %arg3[%c0_11, %c144, %c0_12] : memref<1x288x128xf32, #tpu.memory_space<vmem>>, vector<1x1x128xf32>
    %15 = vector.shape_cast %14 : vector<1x1x128xf32> to vector<1x128xf32>
    %16 = vector.broadcast %15 : vector<1x128xf32> to vector<8x128xf32>
    %17 = arith.addf %13, %16 : vector<8x128xf32>
    %cst_13 = arith.constant 0.000000e+00 : f32
    %18 = vector.broadcast %cst_13 : f32 to vector<8x128xf32>
    %19 = arith.maximumf %17, %18 : vector<8x128xf32>
    %c0_14 = arith.constant 0 : index
    %c152 = arith.constant 152 : index
    %c0_15 = arith.constant 0 : index
    %20 = vector.load %arg3[%c0_14, %c152, %c0_15] : memref<1x288x128xf32, #tpu.memory_space<vmem>>, vector<1x128x128xf32>
    %21 = vector.shape_cast %20 : vector<1x128x128xf32> to vector<128x128xf32>
    %cst_16 = arith.constant dense<0.000000e+00> : vector<8x128xf32>
    %22 = tpu.matmul %19, %21, %cst_16 {dimension_numbers = #tpu.dot_dimension_numbers<[1], [0], [0], [1], [0, 0, 1, 1], [], []>} : vector<8x128xf32>, vector<128x128xf32>, vector<8x128xf32> -> vector<8x128xf32>
    %c0_17 = arith.constant 0 : index
    %c280 = arith.constant 280 : index
    %c0_18 = arith.constant 0 : index
    %23 = vector.load %arg3[%c0_17, %c280, %c0_18] : memref<1x288x128xf32, #tpu.memory_space<vmem>>, vector<1x1x128xf32>
    %24 = vector.shape_cast %23 : vector<1x1x128xf32> to vector<1x128xf32>
    %25 = vector.broadcast %24 : vector<1x128xf32> to vector<8x128xf32>
    %26 = arith.addf %22, %25 : vector<8x128xf32>
    %c0_19 = arith.constant 0 : index
    %c0_20 = arith.constant 0 : index
    %c0_21 = arith.constant 0 : index
    %27 = vector.load %arg4[%c0_19, %c0_20, %c0_21] : memref<1x8x128xf32, #tpu.memory_space<vmem>>, vector<1x8x128xf32>
    %28 = vector.shape_cast %27 : vector<1x8x128xf32> to vector<8x128xf32>
    %29 = vector.shape_cast %26 : vector<8x128xf32> to vector<1x8x128xf32>
    tpu.vector_store %arg4[%c0_19, %c0_20, %c0_21], %29 {strides = array<i32>} : memref<1x8x128xf32, #tpu.memory_space<vmem>>, vector<1x8x128xf32>,
    return
  }
  func.func @transform_0(%arg0: i32, %arg1: i32) -> (i32, i32, i32) {
    %c0_i32 = arith.constant 0 : i32
    %c0_i32_0 = arith.constant 0 : i32
    return %arg0, %arg1, %c0_i32 : i32, i32, i32
  }
  func.func @transform_1(%arg0: i32, %arg1: i32) -> (i32, i32, i32) {
    %c0_i32 = arith.constant 0 : i32
    %c0_i32_0 = arith.constant 0 : i32
    %c0_i32_1 = arith.constant 0 : i32
    return %arg0, %c0_i32, %c0_i32_0 : i32, i32, i32
  }
  func.func @transform_2(%arg0: i32, %arg1: i32) -> (i32, i32, i32) {
    %c0_i32 = arith.constant 0 : i32
    %c0_i32_0 = arith.constant 0 : i32
    return %arg0, %arg1, %c0_i32 : i32, i32, i32
  }
}

</mosaic_0001>

<llo_original>
// kernel: tpu_custom_call.1
$region0: #{tpu_custom_call.1}
  #allocation0 [shape = 'u32[]', space=smem, size = 0x4, offset = 0x4, fixed_abs, tag = 'smem constant byte address 0x4 - core index']
  #allocation1 [shape = 'u32[144,128]{1,0:T(1,128)}', space=vmem, size = 0x12000, scoped, tag = 'internal scratch']
  %s0 = inlined_call_operand.hbm [shape: f32[2,8,8], index: 0, kind: input, shape index: {}]
  %s1 = inlined_call_operand.hbm [shape: f32[2,288,128], index: 1, kind: input, shape index: {}]
  %s2 = inlined_call_operand.hbm [shape: f32[2,8,128], index: 2, kind: output, shape index: {}]
  %s3 = sld [smem:[#allocation0]]
  $region49: #{tpu_custom_call.1} parent=0
    _
  %s5 = ssub.s32 1, %s3
  %s6 = scalar_select 0, %s5, %s3
  $region1: #{tpu_custom_call.1} parent=0
    #allocation2 [shape = 'u8[8192]{0}', space=vmem, size = 0x2000, scoped, tag = 'input window, operand 0']
    #allocation3 [shape = 's32[2]{0}', space=sflag, size = 0x8, scoped, tag = 'scoped memory for tpu_custom_call.1']
    #allocation4 [shape = 's32[2]{0}', space=sflag, size = 0x8, scoped, tag = 'scoped memory for tpu_custom_call.1']
    #allocation5 [shape = 'u8[294912]{0}', space=vmem, size = 0x48000, scoped, tag = 'input window, operand 1']
    #allocation6 [shape = 's32[2]{0}', space=sflag, size = 0x8, scoped, tag = 'scoped memory for tpu_custom_call.1']
    #allocation7 [shape = 'u8[8192]{0}', space=vmem, size = 0x2000, scoped, tag = 'output window, operand 0']
    %7 = vsyncpa [#allocation3], 0
    %s8 = scalar_lea.sflag [#allocation3], 1
    %9 = vsyncpa %s8, 0
    %10 = vsyncpa [#allocation6], 0
    %s11 = scalar_lea.sflag [#allocation6], 1
    %12 = vsyncpa %s11, 0
    %13 = vsyncpa [#allocation4], 0
    %s14 = scalar_lea.sflag [#allocation4], 1
    %15 = vsyncpa %s14, 0
    loop: start=0, step=1, limit=4
    $region2: #{tpu_custom_call.1} parent=1 // loop_pre_header
      _
    $region3: #{tpu_custom_call.1} parent=1 // loop_header
      %s17 = sphi 0, %s21
      %p18 = scmp.ge.s32.totalorder %s17, 4
      %s24 = sphi 0, %s36
      %s25 = sphi 0, %s32
      %s26 = sphi 0, %s24
      %s27 = sphi 0, %s25
      %s28 = sphi 0, %s26
      %s29 = sphi 0, %s27
      %s41 = sphi 0, %s43
      %s44 = sphi 0, %s41
      %s45 = sphi 0, %s44
      %s61 = sphi 0, %s45
      %s67 = sphi 0, %s69
      %s70 = sphi 0, %s67
      %s71 = sphi 0, %s70
      %s87 = sphi 0, %s71
      %s95 = sphi 0, %s97
      %s98 = sphi 0, %s95
      %s99 = sphi 0, %s98
      %s115 = sphi 0, %s99
    $region4: #{tpu_custom_call.1} parent=1 // loop_header_branch
      %20 = sbr.rel (%p18) target = $region8
    $region5: #{tpu_custom_call.1} parent=1 // loop_body
      %s22 = ssub.s32 %s17, 1
      %s23 = ssub.s32 %s17, 2
      %s30 = sadd.s32 1, %s25
      %p31 = scmp.ge.s32.totalorder %s30, 1
      %s32 = scalar_select %p31, 0, %s30
      %s33 = sadd.s32 1, %s24
      %s34 = scalar_select %p31, %s33, %s24
      %p35 = scmp.ge.s32.totalorder %s34, 2
      %s36 = scalar_select %p35, 0, %s34
      %s37 = ssub.s32 %s24, %s36
      %s38 = ssub.s32 %s25, %s32
      %s39 = sor.u32 %s37, %s38
      %p40 = scmp.eq.s32.totalorder %s39, 0
      %s42 = sadd.s32 %s41, 1
      %s43 = scalar_select %p40, %s41, %s42
      %p46 = pneg %p40
      %p47 = scmp.eq.s32.totalorder %s17, 1
      %p48 = por %p46, %p47
      %p49 = scmp.ne.s32.totalorder %s41, %s44
      %p50 = scmp.eq.s32.totalorder %s17, 0
      %p51 = por %p49, %p50
      %p52 = scmp.ne.s32.totalorder %s41, %s44
      %p53 = scmp.eq.s32.totalorder %s22, 1
      %p54 = por %p52, %p53
      %p55 = scmp.ne.s32.totalorder %s44, %s45
      %p56 = scmp.eq.s32.totalorder %s22, 0
      %p57 = por %p55, %p56
      %p58 = scmp.ne.s32.totalorder %s44, %s45
      %p59 = scmp.eq.s32.totalorder %s23, 1
      %p60 = por %p58, %p59
      %p62 = scmp.ne.s32.totalorder %s45, %s61
      %p63 = scmp.eq.s32.totalorder %s23, 0
      %p64 = por %p62, %p63
      %s65 = ssub.s32 %s24, %s36
      %p66 = scmp.eq.s32.totalorder %s65, 0
      %s68 = sadd.s32 %s67, 1
      %s69 = scalar_select %p66, %s67, %s68
      %p72 = pneg %p66
      %p73 = scmp.eq.s32.totalorder %s17, 1
      %p74 = por %p72, %p73
      %p75 = scmp.ne.s32.totalorder %s67, %s70
      %p76 = scmp.eq.s32.totalorder %s17, 0
      %p77 = por %p75, %p76
      %p78 = scmp.ne.s32.totalorder %s67, %s70
      %p79 = scmp.eq.s32.totalorder %s22, 1
      %p80 = por %p78, %p79
      %p81 = scmp.ne.s32.totalorder %s70, %s71
      %p82 = scmp.eq.s32.totalorder %s22, 0
      %p83 = por %p81, %p82
      %p84 = scmp.ne.s32.totalorder %s70, %s71
      %p85 = scmp.eq.s32.totalorder %s23, 1
      %p86 = por %p84, %p85
      %p88 = scmp.ne.s32.totalorder %s71, %s87
      %p89 = scmp.eq.s32.totalorder %s23, 0
      %p90 = por %p88, %p89
      %s91 = ssub.s32 %s24, %s36
      %s92 = ssub.s32 %s25, %s32
      %s93 = sor.u32 %s91, %s92
      %p94 = scmp.eq.s32.totalorder %s93, 0
      %s96 = sadd.s32 %s95, 1
      %s97 = scalar_select %p94, %s95, %s96
      %p100 = pneg %p94
      %p101 = scmp.eq.s32.totalorder %s17, 1
      %p102 = por %p100, %p101
      %p103 = scmp.ne.s32.totalorder %s95, %s98
      %p104 = scmp.eq.s32.totalorder %s17, 0
      %p105 = por %p103, %p104
      %p106 = scmp.ne.s32.totalorder %s95, %s98
      %p107 = scmp.eq.s32.totalorder %s22, 1
      %p108 = por %p106, %p107
      %p109 = scmp.ne.s32.totalorder %s98, %s99
      %p110 = scmp.eq.s32.totalorder %s22, 0
      %p111 = por %p109, %p110
      %p112 = scmp.ne.s32.totalorder %s98, %s99
      %p113 = scmp.eq.s32.totalorder %s23, 1
      %p114 = por %p112, %p113
      %p116 = scmp.ne.s32.totalorder %s99, %s115
      %p117 = scmp.eq.s32.totalorder %s23, 0
      %p118 = por %p116, %p117
      %p119 = scmp.le.s32.totalorder 1, %s17
      %p120 = scmp.lt.s32.totalorder %s17, 3
      %p121 = pnand %p119, %p120
      %p122 = pneg %p121
      // Predicated region
      $region9: #{tpu_custom_call.1} parent=5 // pred_check
        _
      $region10: #{tpu_custom_call.1} parent=5 // pred_check_branch
        %124 = sbr.rel (%p121) target = $region12
      $region11: #{tpu_custom_call.1} parent=5 // pred_region
        %s125 = ssub.s32 %s17, 1
      $region12: #{tpu_custom_call.1} parent=5 // pred_fallthru
        _
      %p126 = scmp.lt.s32.totalorder %s17, 2
      // Predicated region
      $region13: #{tpu_custom_call.1} parent=5 // pred_check
        %p127 = pneg %p126
      $region14: #{tpu_custom_call.1} parent=5 // pred_check_branch
        %129 = sbr.rel (%p127) target = $region16
      $region15: #{tpu_custom_call.1} parent=5 // pred_region
        // Predicated region
        $region17: #{tpu_custom_call.1} parent=15 // pred_check
          %p130 = pneg %p51
        $region18: #{tpu_custom_call.1} parent=15 // pred_check_branch
          %132 = sbr.rel (%p130) target = $region20
        $region19: #{tpu_custom_call.1} parent=15 // pred_region
          %s133 = sand.u32 %s41, 1
          %s134 = scalar_lea.sflag [#allocation3], %s133
          %s135 = sand.u32 %s41, 1
          %s136 = smul.addr %s135, 8
          %s137 = scalar_lea.vmem [#allocation2], %s136
          %s139 = ssub.s32 128, 128
          %140 = vsyncadd %s134, %s139
          %s141 = sadd.s32 %s25, %s24
          %s142 = smul.addr %s141, 128
          %s143 = scalar_lea.hbm %s0, %s142
          %s145 = sshll.u32 %s137, 4
          %s146 = int_to_ptr.vmem [resolvable:$true] %s145
          %148 = dma.hbm_to_vmem [thread:$0]  %s143, 128, %s146, %s134
        $region20: #{tpu_custom_call.1} parent=15 // pred_fallthru
          _
        // Predicated region
        $region21: #{tpu_custom_call.1} parent=15 // pred_check
          %p149 = pneg %p77
        $region22: #{tpu_custom_call.1} parent=15 // pred_check_branch
          %151 = sbr.rel (%p149) target = $region24
        $region23: #{tpu_custom_call.1} parent=15 // pred_region
          %s152 = sand.u32 %s67, 1
          %s153 = scalar_lea.sflag [#allocation6], %s152
          %s154 = sand.u32 %s67, 1
          %s155 = smul.addr %s154, 288
          %s156 = scalar_lea.vmem [#allocation5], %s155
          %s158 = ssub.s32 4608, 4608
          %159 = vsyncadd %s153, %s158
          %s160 = smul.addr %s24, 36
          %s161 = smul.addr %s160, 128
          %s162 = scalar_lea.hbm %s1, %s161
          %s163 = sshll.u32 %s156, 4
          %s164 = int_to_ptr.vmem [resolvable:$true] %s163
          %169 = dma.hbm_to_vmem [thread:$0]  %s162, 4608, %s164, %s153, 128, 128, 8
        $region24: #{tpu_custom_call.1} parent=15 // pred_fallthru
          _
      $region16: #{tpu_custom_call.1} parent=5 // pred_fallthru
        _
      %p170 = scmp.le.s32.totalorder 1, %s17
      %p171 = scmp.lt.s32.totalorder %s17, 3
      %p172 = pnand %p170, %p171
      %p173 = pneg %p172
      // Predicated region
      $region25: #{tpu_custom_call.1} parent=5 // pred_check
        _
      $region26: #{tpu_custom_call.1} parent=5 // pred_check_branch
        %175 = sbr.rel (%p172) target = $region28
      $region27: #{tpu_custom_call.1} parent=5 // pred_region
        %s176 = ssub.s32 %s17, 1
        %s177 = sand.u32 %s44, 1
        %s178 = scalar_lea.sflag [#allocation3], %s177
        %s179 = sand.u32 %s44, 1
        %s180 = smul.addr %s179, 8
        %s181 = scalar_lea.vmem [#allocation2], %s180
        // Predicated region
        $region29: #{tpu_custom_call.1} parent=27 // pred_check
          %p182 = pneg %p57
        $region30: #{tpu_custom_call.1} parent=27 // pred_check_branch
          %184 = sbr.rel (%p182) target = $region32
        $region31: #{tpu_custom_call.1} parent=27 // pred_region
          %185 = dma.done %s178, 128
        $region32: #{tpu_custom_call.1} parent=27 // pred_fallthru
          _
        %s186 = sand.u32 %s70, 1
        %s187 = scalar_lea.sflag [#allocation6], %s186
        %s188 = sand.u32 %s70, 1
        %s189 = smul.addr %s188, 288
        %s190 = scalar_lea.vmem [#allocation5], %s189
        // Predicated region
        $region33: #{tpu_custom_call.1} parent=27 // pred_check
          %p191 = pneg %p83
        $region34: #{tpu_custom_call.1} parent=27 // pred_check_branch
          %193 = sbr.rel (%p191) target = $region36
        $region35: #{tpu_custom_call.1} parent=27 // pred_region
          %194 = dma.done %s187, 4608
        $region36: #{tpu_custom_call.1} parent=27 // pred_fallthru
          _
        %s195 = sand.u32 %s44, 1
        %s196 = scalar_lea.sflag [#allocation3], %s195
        %s197 = sand.u32 %s44, 1
        %s198 = smul.addr %s197, 8
        %s199 = scalar_lea.vmem [#allocation2], %s198
        %p200 = pneg %p57
        %p201 = pneg %p54
        %s202 = sand.u32 %s70, 1
        %s203 = scalar_lea.sflag [#allocation6], %s202
        %s204 = sand.u32 %s70, 1
        %s205 = smul.addr %s204, 288
        %s206 = scalar_lea.vmem [#allocation5], %s205
        %p207 = pneg %p83
        %p208 = pneg %p80
        %p209 = pneg %p111
        %p210 = pneg %p108
        %s211 = sand.u32 %s98, 1
        %s212 = scalar_lea.sflag [#allocation4], %s211
        %s213 = sand.u32 %s98, 1
        %s214 = smul.addr %s213, 8
        %s215 = scalar_lea.vmem [#allocation7], %s214
        %v216 = vld [vmem:[%s181] sm:$0xff]
        %v217 = vld [vmem:[%s190] sm:$0xff]
        %v218 = vld [vmem:[%s190 + $0x8] sm:$0x1]
        %v219 = vlaneseq
        %v220 = vshrl.u32 %v219, 7
        %v221 = vsub.s32 0, %v220
        %v222 = vrot.slane %v218, %v221
        %vm223 = vcmask 64512
        %v225 = vsel %vm223, %v216, 0
        %227 = vmatprep.subr.mxu0 0.0
        %228 = vmatpush1.msra.mxu0 %v217
        %229 = vmatprep.subr.mxu0 0.0
        %230 = vmatpush1.msra.mxu0 0.0
        %231 = vmatprep.subr.mxu0 0.0
        %232 = vmatpush1.msra.mxu0 0.0
        %233 = vmatprep.subr.mxu0 0.0
        %234 = vmatpush1.msra.mxu0 0.0
        %235 = vmatprep.subr.mxu0 0.0
        %236 = vmatpush1.msra.mxu0 0.0
        %237 = vmatprep.subr.mxu0 0.0
        %238 = vmatpush1.msra.mxu0 0.0
        %239 = vmatprep.subr.mxu0 0.0
        %240 = vmatpush1.msra.mxu0 0.0
        %241 = vmatprep.subr.mxu0 0.0
        %242 = vmatpush1.msra.mxu0 0.0
        %243 = vmatprep.subr.mxu0 0.0
        %244 = vmatpush1.msra.mxu0 0.0
        %245 = vmatprep.subr.mxu0 0.0
        %246 = vmatpush1.msra.mxu0 0.0
        %247 = vmatprep.subr.mxu0 0.0
        %248 = vmatpush1.msra.mxu0 0.0
        %249 = vmatprep.subr.mxu0 0.0
        %250 = vmatpush1.msra.mxu0 0.0
        %251 = vmatprep.subr.mxu0 0.0
        %252 = vmatpush1.msra.mxu0 0.0
        %253 = vmatprep.subr.mxu0 0.0
        %254 = vmatpush1.msra.mxu0 0.0
        %255 = vmatprep.subr.mxu0 0.0
        %256 = vmatpush1.msra.mxu0 0.0
        %257 = vmatprep.subr.mxu0 0.0
        %258 = vmatpush1.msra.mxu0 0.0
        %259 = vmatprep.subr.mxu0 0.0
        %260 = vmatpush1.msra.mxu0 0.0
        %261 = vmatprep.subr.mxu0 0.0
        %262 = vmatpush1.msra.mxu0 0.0
        %263 = vmatprep.subr.mxu0 0.0
        %264 = vmatpush1.msra.mxu0 0.0
        %265 = vmatprep.subr.mxu0 0.0
        %266 = vmatpush1.msra.mxu0 0.0
        %267 = vmatprep.subr.mxu0 0.0
        %268 = vmatpush1.msra.mxu0 0.0
        %269 = vmatprep.subr.mxu0 0.0
        %270 = vmatpush1.msra.mxu0 0.0
        %271 = vmatprep.subr.mxu0 0.0
        %272 = vmatpush1.msra.mxu0 0.0
        %273 = vmatprep.subr.mxu0 0.0
        %274 = vmatpush1.msra.mxu0 0.0
        %275 = vmatprep.subr.mxu0 0.0
        %276 = vmatpush1.msra.mxu0 0.0
        %277 = vmatprep.subr.mxu0 0.0
        %278 = vmatpush1.msra.mxu0 0.0
        %279 = vmatprep.subr.mxu0 0.0
        %280 = vmatpush1.msra.mxu0 0.0
        %281 = vmatprep.subr.mxu0 0.0
        %282 = vmatpush1.msra.mxu0 0.0
        %283 = vmatprep.subr.mxu0 0.0
        %284 = vmatpush1.msra.mxu0 0.0
        %285 = vmatprep.subr.mxu0 0.0
        %286 = vmatpush1.msra.mxu0 0.0
        %287 = vmatprep.subr.mxu0 0.0
        %288 = vmatpush1.msra.mxu0 0.0
        %289 = vmatprep.subr.mxu0 0.0
        %290 = vmatpush1.msra.mxu0 0.0
        %291 = vmatprep.mubr.f32.mxu0 0.0
        %292 = vmatmul.mubr.f32.gmra.mrb[0].mxu0 %v225
        %v293 = vpop.f32.mrb[0].mxu0
        %v294 = vadd.f32 %v222, %v293
        %v295 = vpop.f32.mrb[0].mxu0
        %296 = vdwg.mxu0
        %v297 = vmax.f32 %v294, 0.0
        %v298 = vld [vmem:[%s190 + $0x10] sm:$0xff]
        %v299 = vld [vmem:[%s190 + $0x18] sm:$0xff]
        %v300 = vld [vmem:[%s190 + $0x20] sm:$0xff]
        %v301 = vld [vmem:[%s190 + $0x28] sm:$0xff]
        %v302 = vld [vmem:[%s190 + $0x30] sm:$0xff]
        %v303 = vld [vmem:[%s190 + $0x38] sm:$0xff]
        %v304 = vld [vmem:[%s190 + $0x40] sm:$0xff]
        %v305 = vld [vmem:[%s190 + $0x48] sm:$0xff]
        %v306 = vld [vmem:[%s190 + $0x50] sm:$0xff]
        %v307 = vld [vmem:[%s190 + $0x58] sm:$0xff]
        %v308 = vld [vmem:[%s190 + $0x60] sm:$0xff]
        %v309 = vld [vmem:[%s190 + $0x68] sm:$0xff]
        %v310 = vld [vmem:[%s190 + $0x70] sm:$0xff]
        %v311 = vld [vmem:[%s190 + $0x78] sm:$0xff]
        %v312 = vld [vmem:[%s190 + $0x80] sm:$0xff]
        %v313 = vld [vmem:[%s190 + $0x88] sm:$0xff]
        %v314 = vld [vmem:[%s190 + $0x90] sm:$0x1]
        %v315 = vlaneseq
        %v316 = vshrl.u32 %v315, 7
        %v317 = vsub.s32 0, %v316
        %v318 = vrot.slane %v314, %v317
        %319 = vmatprep.subr.mxu0 0.0
        %320 = vmatpush1.msra.mxu0 %v298
        %321 = vmatprep.subr.mxu0 0.0
        %322 = vmatpush1.msra.mxu0 %v299
        %323 = vmatprep.subr.mxu0 0.0
        %324 = vmatpush1.msra.mxu0 %v300
        %325 = vmatprep.subr.mxu0 0.0
        %326 = vmatpush1.msra.mxu0 %v301
        %327 = vmatprep.subr.mxu0 0.0
        %328 = vmatpush1.msra.mxu0 %v302
        %329 = vmatprep.subr.mxu0 0.0
        %330 = vmatpush1.msra.mxu0 %v303
        %331 = vmatprep.subr.mxu0 0.0
        %332 = vmatpush1.msra.mxu0 %v304
        %333 = vmatprep.subr.mxu0 0.0
        %334 = vmatpush1.msra.mxu0 %v305
        %335 = vmatprep.subr.mxu0 0.0
        %336 = vmatpush1.msra.mxu0 %v306
        %337 = vmatprep.subr.mxu0 0.0
        %338 = vmatpush1.msra.mxu0 %v307
        %339 = vmatprep.subr.mxu0 0.0
        %340 = vmatpush1.msra.mxu0 %v308
        %341 = vmatprep.subr.mxu0 0.0
        %342 = vmatpush1.msra.mxu0 %v309
        %343 = vmatprep.subr.mxu0 0.0
        %344 = vmatpush1.msra.mxu0 %v310
        %345 = vmatprep.subr.mxu0 0.0
        %346 = vmatpush1.msra.mxu0 %v311
        %347 = vmatprep.subr.mxu0 0.0
        %348 = vmatpush1.msra.mxu0 %v312
        %349 = vmatprep.subr.mxu0 0.0
        %350 = vmatpush1.msra.mxu0 %v313
        %351 = vmatprep.subr.mxu0 0.0
        %352 = vmatpush1.msra.mxu0 0.0
        %353 = vmatprep.subr.mxu0 0.0
        %354 = vmatpush1.msra.mxu0 0.0
        %355 = vmatprep.subr.mxu0 0.0
        %356 = vmatpush1.msra.mxu0 0.0
        %357 = vmatprep.subr.mxu0 0.0
        %358 = vmatpush1.msra.mxu0 0.0
        %359 = vmatprep.subr.mxu0 0.0
        %360 = vmatpush1.msra.mxu0 0.0
        %361 = vmatprep.subr.mxu0 0.0
        %362 = vmatpush1.msra.mxu0 0.0
        %363 = vmatprep.subr.mxu0 0.0
        %364 = vmatpush1.msra.mxu0 0.0
        %365 = vmatprep.subr.mxu0 0.0
        %366 = vmatpush1.msra.mxu0 0.0
        %367 = vmatprep.subr.mxu0 0.0
        %368 = vmatpush1.msra.mxu0 0.0
        %369 = vmatprep.subr.mxu0 0.0
        %370 = vmatpush1.msra.mxu0 0.0
        %371 = vmatprep.subr.mxu0 0.0
        %372 = vmatpush1.msra.mxu0 0.0
        %373 = vmatprep.subr.mxu0 0.0
        %374 = vmatpush1.msra.mxu0 0.0
        %375 = vmatprep.subr.mxu0 0.0
        %376 = vmatpush1.msra.mxu0 0.0
        %377 = vmatprep.subr.mxu0 0.0
        %378 = vmatpush1.msra.mxu0 0.0
        %379 = vmatprep.subr.mxu0 0.0
        %380 = vmatpush1.msra.mxu0 0.0
        %381 = vmatprep.subr.mxu0 0.0
        %382 = vmatpush1.msra.mxu0 0.0
        %383 = vmatprep.mubr.f32.mxu0 0.0
        %384 = vmatmul.mubr.f32.gmra.mrb[0].mxu0 %v297
        %v385 = vpop.f32.mrb[0].mxu0
        %v386 = vadd.f32 %v318, %v385
        %v387 = vpop.f32.mrb[0].mxu0
        %388 = vdwg.mxu0
        %v389 = vmax.f32 %v386, 0.0
        %v390 = vld [vmem:[%s190 + $0x98] sm:$0xff]
        %v391 = vld [vmem:[%s190 + $0xa0] sm:$0xff]
        %v392 = vld [vmem:[%s190 + $0xa8] sm:$0xff]
        %v393 = vld [vmem:[%s190 + $0xb0] sm:$0xff]
        %v394 = vld [vmem:[%s190 + $0xb8] sm:$0xff]
        %v395 = vld [vmem:[%s190 + $0xc0] sm:$0xff]
        %v396 = vld [vmem:[%s190 + $0xc8] sm:$0xff]
        %v397 = vld [vmem:[%s190 + $0xd0] sm:$0xff]
        %v398 = vld [vmem:[%s190 + $0xd8] sm:$0xff]
        %v399 = vld [vmem:[%s190 + $0xe0] sm:$0xff]
        %v400 = vld [vmem:[%s190 + $0xe8] sm:$0xff]
        %v401 = vld [vmem:[%s190 + $0xf0] sm:$0xff]
        %v402 = vld [vmem:[%s190 + $0xf8] sm:$0xff]
        %v403 = vld [vmem:[%s190 + $0x100] sm:$0xff]
        %v404 = vld [vmem:[%s190 + $0x108] sm:$0xff]
        %v405 = vld [vmem:[%s190 + $0x110] sm:$0xff]
        %v406 = vld [vmem:[%s190 + $0x118] sm:$0x1]
        %v407 = vlaneseq
        %v408 = vshrl.u32 %v407, 7
        %v409 = vsub.s32 0, %v408
        %v410 = vrot.slane %v406, %v409
        %411 = vmatprep.subr.mxu0 0.0
        %412 = vmatpush1.msra.mxu0 %v390
        %413 = vmatprep.subr.mxu0 0.0
        %414 = vmatpush1.msra.mxu0 %v391
        %415 = vmatprep.subr.mxu0 0.0
        %416 = vmatpush1.msra.mxu0 %v392
        %417 = vmatprep.subr.mxu0 0.0
        %418 = vmatpush1.msra.mxu0 %v393
        %419 = vmatprep.subr.mxu0 0.0
        %420 = vmatpush1.msra.mxu0 %v394
        %421 = vmatprep.subr.mxu0 0.0
        %422 = vmatpush1.msra.mxu0 %v395
        %423 = vmatprep.subr.mxu0 0.0
        %424 = vmatpush1.msra.mxu0 %v396
        %425 = vmatprep.subr.mxu0 0.0
        %426 = vmatpush1.msra.mxu0 %v397
        %427 = vmatprep.subr.mxu0 0.0
        %428 = vmatpush1.msra.mxu0 %v398
        %429 = vmatprep.subr.mxu0 0.0
        %430 = vmatpush1.msra.mxu0 %v399
        %431 = vmatprep.subr.mxu0 0.0
        %432 = vmatpush1.msra.mxu0 %v400
        %433 = vmatprep.subr.mxu0 0.0
        %434 = vmatpush1.msra.mxu0 %v401
        %435 = vmatprep.subr.mxu0 0.0
        %436 = vmatpush1.msra.mxu0 %v402
        %437 = vmatprep.subr.mxu0 0.0
        %438 = vmatpush1.msra.mxu0 %v403
        %439 = vmatprep.subr.mxu0 0.0
        %440 = vmatpush1.msra.mxu0 %v404
        %441 = vmatprep.subr.mxu0 0.0
        %442 = vmatpush1.msra.mxu0 %v405
        %443 = vmatprep.subr.mxu0 0.0
        %444 = vmatpush1.msra.mxu0 0.0
        %445 = vmatprep.subr.mxu0 0.0
        %446 = vmatpush1.msra.mxu0 0.0
        %447 = vmatprep.subr.mxu0 0.0
        %448 = vmatpush1.msra.mxu0 0.0
        %449 = vmatprep.subr.mxu0 0.0
        %450 = vmatpush1.msra.mxu0 0.0
        %451 = vmatprep.subr.mxu0 0.0
        %452 = vmatpush1.msra.mxu0 0.0
        %453 = vmatprep.subr.mxu0 0.0
        %454 = vmatpush1.msra.mxu0 0.0
        %455 = vmatprep.subr.mxu0 0.0
        %456 = vmatpush1.msra.mxu0 0.0
        %457 = vmatprep.subr.mxu0 0.0
        %458 = vmatpush1.msra.mxu0 0.0
        %459 = vmatprep.subr.mxu0 0.0
        %460 = vmatpush1.msra.mxu0 0.0
        %461 = vmatprep.subr.mxu0 0.0
        %462 = vmatpush1.msra.mxu0 0.0
        %463 = vmatprep.subr.mxu0 0.0
        %464 = vmatpush1.msra.mxu0 0.0
        %465 = vmatprep.subr.mxu0 0.0
        %466 = vmatpush1.msra.mxu0 0.0
        %467 = vmatprep.subr.mxu0 0.0
        %468 = vmatpush1.msra.mxu0 0.0
        %469 = vmatprep.subr.mxu0 0.0
        %470 = vmatpush1.msra.mxu0 0.0
        %471 = vmatprep.subr.mxu0 0.0
        %472 = vmatpush1.msra.mxu0 0.0
        %473 = vmatprep.subr.mxu0 0.0
        %474 = vmatpush1.msra.mxu0 0.0
        %475 = vmatprep.mubr.f32.mxu0 0.0
        %476 = vmatmul.mubr.f32.gmra.mrb[0].mxu0 %v389
        %v477 = vpop.f32.mrb[0].mxu0
        %v478 = vadd.f32 %v410, %v477
        %v479 = vpop.f32.mrb[0].mxu0
        %480 = vdwg.mxu0
        %481 = vst [vmem:[%s215] sm:$0xff] %v478
        %s482 = sand.u32 %s98, 1
        %s483 = scalar_lea.sflag [#allocation4], %s482
        %s484 = sand.u32 %s98, 1
        %s485 = smul.addr %s484, 8
        %s486 = scalar_lea.vmem [#allocation7], %s485
        // Predicated region
        $region37: #{tpu_custom_call.1} parent=27 // pred_check
          %p487 = pneg %p108
        $region38: #{tpu_custom_call.1} parent=27 // pred_check_branch
          %489 = sbr.rel (%p487) target = $region40
        $region39: #{tpu_custom_call.1} parent=27 // pred_region
          %s491 = ssub.s32 128, 128
          %492 = vsyncadd %s483, %s491
          %s493 = sadd.s32 %s27, %s26
          %s494 = smul.addr %s493, 128
          %s495 = scalar_lea.hbm %s2, %s494
          %s497 = sshll.u32 %s486, 4
          %s498 = int_to_ptr.vmem [resolvable:$true] %s497
          %500 = dma.vmem_to_hbm [thread:$0]  %s498, 128, %s495, %s483
        $region40: #{tpu_custom_call.1} parent=27 // pred_fallthru
          _
      $region28: #{tpu_custom_call.1} parent=5 // pred_fallthru
        _
      %p501 = scmp.le.s32.totalorder 2, %s17
      // Predicated region
      $region41: #{tpu_custom_call.1} parent=5 // pred_check
        %p502 = pneg %p501
      $region42: #{tpu_custom_call.1} parent=5 // pred_check_branch
        %504 = sbr.rel (%p502) target = $region44
      $region43: #{tpu_custom_call.1} parent=5 // pred_region
        %s505 = ssub.s32 %s17, 2
        // Predicated region
        $region45: #{tpu_custom_call.1} parent=43 // pred_check
          %p506 = pneg %p114
        $region46: #{tpu_custom_call.1} parent=43 // pred_check_branch
          %508 = sbr.rel (%p506) target = $region48
        $region47: #{tpu_custom_call.1} parent=43 // pred_region
          %s509 = sand.u32 %s99, 1
          %s510 = scalar_lea.sflag [#allocation4], %s509
          %s511 = sand.u32 %s99, 1
          %s512 = smul.addr %s511, 8
          %s513 = scalar_lea.vmem [#allocation7], %s512
          %514 = dma.done %s510, 128
        $region48: #{tpu_custom_call.1} parent=43 // pred_fallthru
          _
      $region44: #{tpu_custom_call.1} parent=5 // pred_fallthru
        _
    $region6: #{tpu_custom_call.1} parent=1 // loop_footer
      %s21 = sadd.s32 1, %s17
    $region7: #{tpu_custom_call.1} parent=1 // loop_footer_branch
      %16 = sbr.rel target = $region3
    $region8: #{tpu_custom_call.1} parent=1 // loop_exit
      _
    %515 = vsyncpa [#allocation3], 1
    %s516 = scalar_lea.sflag [#allocation3], 1
    %517 = vsyncpa %s516, 1
    %518 = vsyncpa [#allocation6], 1
    %s519 = scalar_lea.sflag [#allocation6], 1
    %520 = vsyncpa %s519, 1
    %521 = vsyncpa [#allocation4], 1
    %s522 = scalar_lea.sflag [#allocation4], 1
    %523 = vsyncpa %s522, 1

</llo_original>
